<compile_context>
chip_gen: v7x
topology: tpu7x:2x2x1
jax: 0.10.0
libtpu: 0.0.40
codegen_flags: <defaults>
</compile_context>

<pallas_src>
import functools

import jax
import jax.numpy as jnp
from jax.experimental import pallas as pl
from jax.experimental.pallas import tpu as pltpu


# --------------------------------------------------------------------------- #
# Kernel
# --------------------------------------------------------------------------- #
def _fused_mlp_kernel(x_ref, *refs, n_layers: int):
    """Fused MLP over one batch tile.

    x_ref : (TB, Din)  VMEM, f32 (cast to weight dtype in-kernel)
    refs  : w1, b1, ..., wn, bn, o_ref
            w_i : (D_{i-1}, D_i) VMEM (bf16 or f32)
            b_i : (1, D_i)       VMEM (f32)
    o_ref : (TB, Dpad) VMEM (f32), Dpad lane-dense (multiple of 128)
    """
    o_ref = refs[-1]
    h = x_ref[...]
    for i in range(n_layers):
        w = refs[2 * i][...]
        b = refs[2 * i + 1][...]
        # MXU matmul, f32 accumulation; activation cast to the weight dtype.
        y = jnp.dot(h.astype(w.dtype), w, preferred_element_type=jnp.float32)
        y = y + b                      # (1, D) bias broadcast, f32
        if i != n_layers - 1:
            y = jnp.maximum(y, 0.0)    # ReLU on all but the last layer
        h = y
    o_ref[...] = h.astype(o_ref.dtype)


# --------------------------------------------------------------------------- #
# Host-side helpers
# --------------------------------------------------------------------------- #
def _num_tensorcores() -> int:
    """Best-effort TensorCore count of device 0 (2 on v7x, 1 on v5e/v6e)."""
    try:
        dev = jax.devices()[0]
        v = getattr(dev, "num_cores", None)
        if isinstance(v, int) and v >= 1:
            return v
        kind = str(getattr(dev, "device_kind", "")).lower()
        if any(t in kind for t in ("v5 lite", "v5e", "v6 lite", "v6e")):
            return 1
    except Exception:
        pass
    # Conservative fallback: 2 keeps both v7x cores busy; on a 1-TC chip it
    # only costs one extra ~0.35us grid step.
    return 2


def init_mlp_params(key, input_dim, output_dim, hidden_size=(256, 128)):
    """Master (f32) parameters matching the nn.Linear layers.

    W stored as (in, out) == torch weight (out, in) transposed; b as (1, out).
    """
    dims = [input_dim, *hidden_size, output_dim]
    params = []
    for i in range(len(dims) - 1):
        key, kw, kb = jax.random.split(key, 3)
        bound = 1.0 / jnp.sqrt(dims[i])
        w = jax.random.uniform(kw, (dims[i], dims[i + 1]), jnp.float32, -bound, bound)
        b = jax.random.uniform(kb, (1, dims[i + 1]), jnp.float32, -bound, bound)
        params.append((w, b))
    return params


def prepare_params(params, *, use_bf16=True, lane_multiple=128):
    """One-time kernel-facing parameter prep (do this once, reuse per call).

    - casts weights to bf16 (halves resident VMEM / weight DMA bytes),
    - zero-pads the LAST layer's W/b output dim to a multiple of 128 so the
      output store is lane-dense (unmasked vst); wrapper slices back.
    Biases stay f32 (bias-add/ReLU are f32 on the VPU; bf16 buys nothing there).
    """
    n = len(params)
    kparams = []
    for i, (w, b) in enumerate(params):
        if i == n - 1:
            pad = (-w.shape[1]) % lane_multiple
            if pad:
                w = jnp.pad(w, ((0, 0), (0, pad)))
                b = jnp.pad(b, ((0, 0), (0, pad)))
        wk = w.astype(jnp.bfloat16) if use_bf16 else w.astype(jnp.float32)
        kparams.append((wk, b.astype(jnp.float32)))
    return kparams


@functools.partial(jax.jit, static_argnames=("out_dim", "block_b"))
def mlp_forward(x, kparams, *, out_dim, block_b=None):
    """Fused MLP forward.

    x       : (B, Din) f32
    kparams : output of prepare_params (bf16 W (in,out), f32 b (1,out))
    out_dim : true output width (last layer may be lane-padded to 128)
    """
    B, Din = x.shape
    n = len(kparams)
    Dpad = kparams[-1][0].shape[1]

    # Batch tile: one tile per TensorCore (>=2 on v7x), capped at 1024 rows,
    # sublane-aligned. Ragged last block is handled by Pallas (masked store).
    if block_b is not None:
        tb = block_b
    else:
        tiles = max(_num_tensorcores(), pl.cdiv(B, 1024))
        tb = -(-B // tiles)            # ceil
        tb = -(-tb // 8) * 8           # multiple of 8 (sublane)
    tb = min(tb, B)                    # full-dim block is always legal
    grid = (pl.cdiv(B, tb),)

    # Input spec: batch-tiled x (f32, cast in-kernel).
    in_specs = [pl.BlockSpec((tb, Din), lambda i: (i, 0))]
    flat_args = []
    for (w, b) in kparams:
        flat_args += [w, b]
        # Constant index_map + Buffered(1): DMA'd to VMEM once, single
        # buffered, resident across every batch-tile grid step.
        in_specs += [
            pl.BlockSpec(w.shape, lambda i: (0, 0), pipeline_mode=pl.Buffered(1)),
            pl.BlockSpec(b.shape, lambda i: (0, 0), pipeline_mode=pl.Buffered(1)),
        ]

    # Explicit VMEM limit only when the resident footprint gets large
    # (future-proofing wide MLPs on v7x's 64 MiB; tiny configs use the default).
    weight_bytes = sum(w.size * w.dtype.itemsize + b.size * b.dtype.itemsize
                       for (w, b) in kparams)
    widest = max(max(w.shape) for (w, _) in kparams)
    est = (weight_bytes
           + 2 * tb * Din * x.dtype.itemsize      # double-buffered x tile
           + 2 * tb * Dpad * 4                    # double-buffered out tile
           + 4 * tb * widest * 4)                 # f32 activation headroom
    vmem_limit = int(min(2 * est, 60 << 20)) if est > (24 << 20) else None

    out = pl.pallas_call(
        functools.partial(_fused_mlp_kernel, n_layers=n),
        out_shape=jax.ShapeDtypeStruct((B, Dpad), jnp.float32),
        grid=grid,
        in_specs=in_specs,
        out_specs=pl.BlockSpec((tb, Dpad), lambda i: (i, 0)),
        compiler_params=pltpu.CompilerParams(
            dimension_semantics=("parallel",),
            vmem_limit_bytes=vmem_limit,
        ),
    )(x, *flat_args)

    return out[:, :out_dim] if Dpad != out_dim else out


def mlp_reference(x, params, *, use_bf16):
    """Pure-JAX reference of MLP.forward (Linear -> ReLU ... -> Linear)."""
    n = len(params)
    h = x
    for i, (w, b) in enumerate(params):
        if use_bf16:
            y = jnp.dot(h.astype(jnp.bfloat16), w.astype(jnp.bfloat16),
                        preferred_element_type=jnp.float32)
        else:
            y = jnp.dot(h, w, preferred_element_type=jnp.float32)
        y = y + b
        if i != n - 1:
            y = jnp.maximum(y, 0.0)
        h = y
    return h


# --------------------------------------------------------------------------- #
# Self-test
# --------------------------------------------------------------------------- #
if __name__ == "__main__":
    key = jax.random.PRNGKey(0)
    batch, input_dim, output_dim = 256, 16, 8
    hidden = (256, 128)

    kx, kp = jax.random.split(key)
    x = jax.random.normal(kx, (batch, input_dim), jnp.float32)
    params = init_mlp_params(kp, input_dim, output_dim, hidden)

    # 1) Production path: bf16 weights (prepared once), f32 accumulation.
    kparams_bf16 = prepare_params(params, use_bf16=True)
    out = jax.block_until_ready(mlp_forward(x, kparams_bf16, out_dim=output_dim))
    ref = mlp_reference(x, params, use_bf16=True)
    assert out.shape == (batch, output_dim)
    assert jnp.allclose(out, ref, atol=2e-3, rtol=2e-3), (
        "bf16 path mismatch: max abs diff %e" % float(jnp.max(jnp.abs(out - ref))))

    # 2) Ragged batch (B not a multiple of the tile): exercises the
    #    pl.cdiv grid with a masked last block (no host-side pad/slice).
    xr = x[:200]
    out_r = jax.block_until_ready(mlp_forward(xr, kparams_bf16, out_dim=output_dim))
    ref_r = mlp_reference(xr, params, use_bf16=True)
    assert out_r.shape == (200, output_dim)
    assert jnp.allclose(out_r, ref_r, atol=2e-3, rtol=2e-3), (
        "ragged-batch mismatch: max abs diff %e" % float(jnp.max(jnp.abs(out_r - ref_r))))

    # 3) f32-weight path. Note: default MXU precision lowers f32 matmuls to
    #    bf16 passes (both in the kernel and in the XLA reference), so this is
    #    not strict fp32 parity with PyTorch — tolerance sized accordingly.
    kparams_f32 = prepare_params(params, use_bf16=False)
    out_f = jax.block_until_ready(mlp_forward(x, kparams_f32, out_dim=output_dim))
    ref_f = mlp_reference(x, params, use_bf16=False)
    assert out_f.shape == (batch, output_dim)
    assert jnp.allclose(out_f, ref_f, atol=2e-2, rtol=2e-2), (
        "f32 path mismatch: max abs diff %e" % float(jnp.max(jnp.abs(out_f - ref_f))))

    # TODO(synk): train-time Dropout (dropout=-1 default) and the discrim
    # sigmoid branch (discrim=False default) are disabled under module defaults.
    print("KERNEL_OK")
</pallas_src>

<mosaic_0001>
module attributes {stable_mosaic.version = 11 : i64} {
  func.func @_fused_mlp_kernel(%arg0: i32, %arg1: memref<128x16xf32, #tpu.memory_space<vmem>>, %arg2: memref<16x256xbf16, #tpu.memory_space<vmem>>, %arg3: memref<1x256xf32, #tpu.memory_space<vmem>>, %arg4: memref<256x128xbf16, #tpu.memory_space<vmem>>, %arg5: memref<1x128xf32, #tpu.memory_space<vmem>>, %arg6: memref<128x128xbf16, #tpu.memory_space<vmem>>, %arg7: memref<1x128xf32, #tpu.memory_space<vmem>>, %arg8: memref<128x128xf32, #tpu.memory_space<vmem>>) attributes {dimension_semantics = [#tpu.dimension_semantics<parallel>], iteration_bounds = array<i64: 2>, scalar_prefetch = 0 : i64, scratch_operands = 0 : i64, tpu.core_type = #tpu.core_type<tc>, window_params = [{transform_indices = @transform_0, window_bounds = array<i64: 128, 16>}, {pipeline_mode = #tpu.pipeline_mode<synchronous>, transform_indices = @transform_1, window_bounds = array<i64: 16, 256>}, {pipeline_mode = #tpu.pipeline_mode<synchronous>, transform_indices = @transform_2, window_bounds = array<i64: 1, 256>}, {pipeline_mode = #tpu.pipeline_mode<synchronous>, transform_indices = @transform_3, window_bounds = array<i64: 256, 128>}, {pipeline_mode = #tpu.pipeline_mode<synchronous>, transform_indices = @transform_4, window_bounds = array<i64: 1, 128>}, {pipeline_mode = #tpu.pipeline_mode<synchronous>, transform_indices = @transform_5, window_bounds = array<i64: 128, 128>}, {pipeline_mode = #tpu.pipeline_mode<synchronous>, transform_indices = @transform_6, window_bounds = array<i64: 1, 128>}, {transform_indices = @transform_7, window_bounds = array<i64: 128, 128>}]} {
    %c0 = arith.constant 0 : index
    %c0_0 = arith.constant 0 : index
    %0 = vector.load %arg1[%c0, %c0_0] : memref<128x16xf32, #tpu.memory_space<vmem>>, vector<128x16xf32>
    %c0_1 = arith.constant 0 : index
    %c0_2 = arith.constant 0 : index
    %1 = vector.load %arg2[%c0_1, %c0_2] : memref<16x256xbf16, #tpu.memory_space<vmem>>, vector<16x256xbf16>
    %c0_3 = arith.constant 0 : index
    %c0_4 = arith.constant 0 : index
    %2 = vector.load %arg3[%c0_3, %c0_4] : memref<1x256xf32, #tpu.memory_space<vmem>>, vector<1x256xf32>
    %3 = arith.truncf %0 : vector<128x16xf32> to vector<128x16xbf16>
    %cst = arith.constant dense<0.000000e+00> : vector<128x256xf32>
    %4 = tpu.matmul %3, %1, %cst {dimension_numbers = #tpu.dot_dimension_numbers<[1], [0], [0], [1], [0, 0, 1, 1], [], []>} : vector<128x16xbf16>, vector<16x256xbf16>, vector<128x256xf32> -> vector<128x256xf32>
    %5 = vector.broadcast %2 : vector<1x256xf32> to vector<128x256xf32>
    %6 = arith.addf %4, %5 : vector<128x256xf32>
    %cst_5 = arith.constant 0.000000e+00 : f32
    %7 = vector.broadcast %cst_5 : f32 to vector<128x256xf32>
    %8 = arith.maximumf %6, %7 : vector<128x256xf32>
    %c0_6 = arith.constant 0 : index
    %c0_7 = arith.constant 0 : index
    %9 = vector.load %arg4[%c0_6, %c0_7] : memref<256x128xbf16, #tpu.memory_space<vmem>>, vector<256x128xbf16>
    %c0_8 = arith.constant 0 : index
    %c0_9 = arith.constant 0 : index
    %10 = vector.load %arg5[%c0_8, %c0_9] : memref<1x128xf32, #tpu.memory_space<vmem>>, vector<1x128xf32>
    %11 = arith.truncf %8 : vector<128x256xf32> to vector<128x256xbf16>
    %cst_10 = arith.constant dense<0.000000e+00> : vector<128x128xf32>
    %12 = tpu.matmul %11, %9, %cst_10 {dimension_numbers = #tpu.dot_dimension_numbers<[1], [0], [0], [1], [0, 0, 1, 1], [], []>} : vector<128x256xbf16>, vector<256x128xbf16>, vector<128x128xf32> -> vector<128x128xf32>
    %13 = vector.broadcast %10 : vector<1x128xf32> to vector<128x128xf32>
    %14 = arith.addf %12, %13 : vector<128x128xf32>
    %cst_11 = arith.constant 0.000000e+00 : f32
    %15 = vector.broadcast %cst_11 : f32 to vector<128x128xf32>
    %16 = arith.maximumf %14, %15 : vector<128x128xf32>
    %c0_12 = arith.constant 0 : index
    %c0_13 = arith.constant 0 : index
    %17 = vector.load %arg6[%c0_12, %c0_13] : memref<128x128xbf16, #tpu.memory_space<vmem>>, vector<128x128xbf16>
    %c0_14 = arith.constant 0 : index
    %c0_15 = arith.constant 0 : index
    %18 = vector.load %arg7[%c0_14, %c0_15] : memref<1x128xf32, #tpu.memory_space<vmem>>, vector<1x128xf32>
    %19 = arith.truncf %16 : vector<128x128xf32> to vector<128x128xbf16>
    %cst_16 = arith.constant dense<0.000000e+00> : vector<128x128xf32>
    %20 = tpu.matmul %19, %17, %cst_16 {dimension_numbers = #tpu.dot_dimension_numbers<[1], [0], [0], [1], [0, 0, 1, 1], [], []>} : vector<128x128xbf16>, vector<128x128xbf16>, vector<128x128xf32> -> vector<128x128xf32>
    %21 = vector.broadcast %18 : vector<1x128xf32> to vector<128x128xf32>
    %22 = arith.addf %20, %21 : vector<128x128xf32>
    %c0_17 = arith.constant 0 : index
    %c0_18 = arith.constant 0 : index
    %23 = vector.load %arg8[%c0_17, %c0_18] : memref<128x128xf32, #tpu.memory_space<vmem>>, vector<128x128xf32>
    tpu.vector_store %arg8[%c0_17, %c0_18], %22 {strides = array<i32>} : memref<128x128xf32, #tpu.memory_space<vmem>>, vector<128x128xf32>,
    return
  }
  func.func @transform_0(%arg0: i32) -> (i32, i32) {
    %c0_i32 = arith.constant 0 : i32
    %c0_i32_0 = arith.constant 0 : i32
    return %arg0, %c0_i32 : i32, i32
  }
  func.func @transform_1(%arg0: i32) -> (i32, i32) {
    %c0_i32 = arith.constant 0 : i32
    %c0_i32_0 = arith.constant 0 : i32
    %c0_i32_1 = arith.constant 0 : i32
    return %c0_i32, %c0_i32_0 : i32, i32
  }
  func.func @transform_2(%arg0: i32) -> (i32, i32) {
    %c0_i32 = arith.constant 0 : i32
    %c0_i32_0 = arith.constant 0 : i32
    %c0_i32_1 = arith.constant 0 : i32
    return %c0_i32, %c0_i32_0 : i32, i32
  }
  func.func @transform_3(%arg0: i32) -> (i32, i32) {
    %c0_i32 = arith.constant 0 : i32
    %c0_i32_0 = arith.constant 0 : i32
    %c0_i32_1 = arith.constant 0 : i32
    return %c0_i32, %c0_i32_0 : i32, i32
  }
  func.func @transform_4(%arg0: i32) -> (i32, i32) {
    %c0_i32 = arith.constant 0 : i32
    %c0_i32_0 = arith.constant 0 : i32
    %c0_i32_1 = arith.constant 0 : i32
    return %c0_i32, %c0_i32_0 : i32, i32
  }
  func.func @transform_5(%arg0: i32) -> (i32, i32) {
    %c0_i32 = arith.constant 0 : i32
    %c0_i32_0 = arith.constant 0 : i32
    %c0_i32_1 = arith.constant 0 : i32
    return %c0_i32, %c0_i32_0 : i32, i32
  }
  func.func @transform_6(%arg0: i32) -> (i32, i32) {
    %c0_i32 = arith.constant 0 : i32
    %c0_i32_0 = arith.constant 0 : i32
    %c0_i32_1 = arith.constant 0 : i32
    return %c0_i32, %c0_i32_0 : i32, i32
  }
  func.func @transform_7(%arg0: i32) -> (i32, i32) {
    %c0_i32 = arith.constant 0 : i32
    %c0_i32_0 = arith.constant 0 : i32
    return %arg0, %c0_i32 : i32, i32
  }
}

</mosaic_0001>

<llo_original>
// kernel: mlp_forward.1
$region0: #{mlp_forward.1}
  #allocation0 [shape = 'u32[]', space=smem, size = 0x4, offset = 0x4, fixed_abs, tag = 'smem constant byte address 0x4 - core index']
  #allocation1 [shape = 'u32[144,128]{1,0:T(1,128)}', space=vmem, size = 0x12000, scoped, tag = 'internal scratch']
  %s0 = inlined_call_operand.vmem [shape: f32[256,16], index: 0, kind: input, shape index: {}]
  %s1 = inlined_call_operand.vmem [shape: bf16[16,256], index: 1, kind: input, shape index: {}]
  %s2 = inlined_call_operand.vmem [shape: f32[1,256], index: 2, kind: input, shape index: {}]
  %s3 = inlined_call_operand.vmem [shape: bf16[256,128], index: 3, kind: input, shape index: {}]
  %s4 = inlined_call_operand.vmem [shape: f32[1,128], index: 4, kind: input, shape index: {}]
  %s5 = inlined_call_operand.vmem [shape: bf16[128,128], index: 5, kind: input, shape index: {}]
  %s6 = inlined_call_operand.vmem [shape: f32[1,128], index: 6, kind: input, shape index: {}]
  %s7 = inlined_call_operand.vmem [shape: f32[256,128], index: 7, kind: output, shape index: {}]
  %s8 = sld [smem:[#allocation0]]
  $region61: #{mlp_forward.1} parent=0
    _
  %s10 = ssub.s32 1, %s8
  %s11 = scalar_select 0, %s10, %s8
  loop: start=0, step=1, limit=4
  $region2: #{mlp_forward.1} parent=0 // loop_pre_header
    _
  $region3: #{mlp_forward.1} parent=0 // loop_header
    %s13 = sphi 0, %s17
    %p14 = scmp.ge.s32.totalorder %s13, 4
    %s23 = sphi 0, %s25
    %s26 = sphi 0, %s23
    %s27 = sphi 0, %s26
    %s43 = sphi 0, %s27
    %s47 = sphi 0, %s47
    %s49 = sphi 0, %s47
    %s50 = sphi 0, %s49
    %s64 = sphi 0, %s50
    %s68 = sphi 0, %s68
    %s70 = sphi 0, %s68
    %s71 = sphi 0, %s70
    %s85 = sphi 0, %s71
    %s89 = sphi 0, %s89
    %s91 = sphi 0, %s89
    %s92 = sphi 0, %s91
    %s106 = sphi 0, %s92
    %s110 = sphi 0, %s110
    %s112 = sphi 0, %s110
    %s113 = sphi 0, %s112
    %s127 = sphi 0, %s113
    %s131 = sphi 0, %s131
    %s133 = sphi 0, %s131
    %s134 = sphi 0, %s133
    %s148 = sphi 0, %s134
    %s152 = sphi 0, %s152
    %s154 = sphi 0, %s152
    %s155 = sphi 0, %s154
    %s169 = sphi 0, %s155
    %s175 = sphi 0, %s177
    %s178 = sphi 0, %s175
    %s179 = sphi 0, %s178
    %s195 = sphi 0, %s179
  $region4: #{mlp_forward.1} parent=0 // loop_header_branch
    %16 = sbr.rel (%p14) target = $region8
  $region5: #{mlp_forward.1} parent=0 // loop_body
    %s18 = ssub.s32 %s13, 1
    %s19 = ssub.s32 %s13, 2
    %s20 = sadd.s32 %s13, 1
    %s21 = ssub.s32 %s13, %s20
    %p22 = scmp.eq.s32.totalorder %s21, 0
    %s24 = sadd.s32 %s23, 1
    %s25 = scalar_select %p22, %s23, %s24
    %p28 = pneg %p22
    %p29 = scmp.eq.s32.totalorder %s13, 1
    %p30 = por %p28, %p29
    %p31 = scmp.ne.s32.totalorder %s23, %s26
    %p32 = scmp.eq.s32.totalorder %s13, 0
    %p33 = por %p31, %p32
    %p34 = scmp.ne.s32.totalorder %s23, %s26
    %p35 = scmp.eq.s32.totalorder %s18, 1
    %p36 = por %p34, %p35
    %p37 = scmp.ne.s32.totalorder %s26, %s27
    %p38 = scmp.eq.s32.totalorder %s18, 0
    %p39 = por %p37, %p38
    %p40 = scmp.ne.s32.totalorder %s26, %s27
    %p41 = scmp.eq.s32.totalorder %s19, 1
    %p42 = por %p40, %p41
    %p44 = scmp.ne.s32.totalorder %s27, %s43
    %p45 = scmp.eq.s32.totalorder %s19, 0
    %p46 = por %p44, %p45
    %s48 = sadd.s32 %s47, 1
    %p51 = scmp.eq.s32.totalorder %s13, 1
    %p52 = scmp.ne.s32.totalorder %s47, %s49
    %p53 = scmp.eq.s32.totalorder %s13, 0
    %p54 = por %p52, %p53
    %p55 = scmp.ne.s32.totalorder %s47, %s49
    %p56 = scmp.eq.s32.totalorder %s18, 1
    %p57 = por %p55, %p56
    %p58 = scmp.ne.s32.totalorder %s49, %s50
    %p59 = scmp.eq.s32.totalorder %s18, 0
    %p60 = por %p58, %p59
    %p61 = scmp.ne.s32.totalorder %s49, %s50
    %p62 = scmp.eq.s32.totalorder %s19, 1
    %p63 = por %p61, %p62
    %p65 = scmp.ne.s32.totalorder %s50, %s64
    %p66 = scmp.eq.s32.totalorder %s19, 0
    %p67 = por %p65, %p66
    %s69 = sadd.s32 %s68, 1
    %p72 = scmp.eq.s32.totalorder %s13, 1
    %p73 = scmp.ne.s32.totalorder %s68, %s70
    %p74 = scmp.eq.s32.totalorder %s13, 0
    %p75 = por %p73, %p74
    %p76 = scmp.ne.s32.totalorder %s68, %s70
    %p77 = scmp.eq.s32.totalorder %s18, 1
    %p78 = por %p76, %p77
    %p79 = scmp.ne.s32.totalorder %s70, %s71
    %p80 = scmp.eq.s32.totalorder %s18, 0
    %p81 = por %p79, %p80
    %p82 = scmp.ne.s32.totalorder %s70, %s71
    %p83 = scmp.eq.s32.totalorder %s19, 1
    %p84 = por %p82, %p83
    %p86 = scmp.ne.s32.totalorder %s71, %s85
    %p87 = scmp.eq.s32.totalorder %s19, 0
    %p88 = por %p86, %p87
    %s90 = sadd.s32 %s89, 1
    %p93 = scmp.eq.s32.totalorder %s13, 1
    %p94 = scmp.ne.s32.totalorder %s89, %s91
    %p95 = scmp.eq.s32.totalorder %s13, 0
    %p96 = por %p94, %p95
    %p97 = scmp.ne.s32.totalorder %s89, %s91
    %p98 = scmp.eq.s32.totalorder %s18, 1
    %p99 = por %p97, %p98
    %p100 = scmp.ne.s32.totalorder %s91, %s92
    %p101 = scmp.eq.s32.totalorder %s18, 0
    %p102 = por %p100, %p101
    %p103 = scmp.ne.s32.totalorder %s91, %s92
    %p104 = scmp.eq.s32.totalorder %s19, 1
    %p105 = por %p103, %p104
    %p107 = scmp.ne.s32.totalorder %s92, %s106
    %p108 = scmp.eq.s32.totalorder %s19, 0
    %p109 = por %p107, %p108
    %s111 = sadd.s32 %s110, 1
    %p114 = scmp.eq.s32.totalorder %s13, 1
    %p115 = scmp.ne.s32.totalorder %s110, %s112
    %p116 = scmp.eq.s32.totalorder %s13, 0
    %p117 = por %p115, %p116
    %p118 = scmp.ne.s32.totalorder %s110, %s112
    %p119 = scmp.eq.s32.totalorder %s18, 1
    %p120 = por %p118, %p119
    %p121 = scmp.ne.s32.totalorder %s112, %s113
    %p122 = scmp.eq.s32.totalorder %s18, 0
    %p123 = por %p121, %p122
    %p124 = scmp.ne.s32.totalorder %s112, %s113
    %p125 = scmp.eq.s32.totalorder %s19, 1
    %p126 = por %p124, %p125
    %p128 = scmp.ne.s32.totalorder %s113, %s127
    %p129 = scmp.eq.s32.totalorder %s19, 0
    %p130 = por %p128, %p129
    %s132 = sadd.s32 %s131, 1
    %p135 = scmp.eq.s32.totalorder %s13, 1
    %p136 = scmp.ne.s32.totalorder %s131, %s133
    %p137 = scmp.eq.s32.totalorder %s13, 0
    %p138 = por %p136, %p137
    %p139 = scmp.ne.s32.totalorder %s131, %s133
    %p140 = scmp.eq.s32.totalorder %s18, 1
    %p141 = por %p139, %p140
    %p142 = scmp.ne.s32.totalorder %s133, %s134
    %p143 = scmp.eq.s32.totalorder %s18, 0
    %p144 = por %p142, %p143
    %p145 = scmp.ne.s32.totalorder %s133, %s134
    %p146 = scmp.eq.s32.totalorder %s19, 1
    %p147 = por %p145, %p146
    %p149 = scmp.ne.s32.totalorder %s134, %s148
    %p150 = scmp.eq.s32.totalorder %s19, 0
    %p151 = por %p149, %p150
    %s153 = sadd.s32 %s152, 1
    %p156 = scmp.eq.s32.totalorder %s13, 1
    %p157 = scmp.ne.s32.totalorder %s152, %s154
    %p158 = scmp.eq.s32.totalorder %s13, 0
    %p159 = por %p157, %p158
    %p160 = scmp.ne.s32.totalorder %s152, %s154
    %p161 = scmp.eq.s32.totalorder %s18, 1
    %p162 = por %p160, %p161
    %p163 = scmp.ne.s32.totalorder %s154, %s155
    %p164 = scmp.eq.s32.totalorder %s18, 0
    %p165 = por %p163, %p164
    %p166 = scmp.ne.s32.totalorder %s154, %s155
    %p167 = scmp.eq.s32.totalorder %s19, 1
    %p168 = por %p166, %p167
    %p170 = scmp.ne.s32.totalorder %s155, %s169
    %p171 = scmp.eq.s32.totalorder %s19, 0
    %p172 = por %p170, %p171
    %s173 = ssub.s32 %s13, %s20
    %p174 = scmp.eq.s32.totalorder %s173, 0
    %s176 = sadd.s32 %s175, 1
    %s177 = scalar_select %p174, %s175, %s176
    %p180 = pneg %p174
    %p181 = scmp.eq.s32.totalorder %s13, 1
    %p182 = por %p180, %p181
    %p183 = scmp.ne.s32.totalorder %s175, %s178
    %p184 = scmp.eq.s32.totalorder %s13, 0
    %p185 = por %p183, %p184
    %p186 = scmp.ne.s32.totalorder %s175, %s178
    %p187 = scmp.eq.s32.totalorder %s18, 1
    %p188 = por %p186, %p187
    %p189 = scmp.ne.s32.totalorder %s178, %s179
    %p190 = scmp.eq.s32.totalorder %s18, 0
    %p191 = por %p189, %p190
    %p192 = scmp.ne.s32.totalorder %s178, %s179
    %p193 = scmp.eq.s32.totalorder %s19, 1
    %p194 = por %p192, %p193
    %p196 = scmp.ne.s32.totalorder %s179, %s195
    %p197 = scmp.eq.s32.totalorder %s19, 0
    %p198 = por %p196, %p197
    %p199 = scmp.le.s32.totalorder 1, %s13
    %p200 = scmp.lt.s32.totalorder %s13, 3
    %p201 = pnand %p199, %p200
    %p202 = pneg %p201
    // Predicated region
    $region9: #{mlp_forward.1} parent=5 // pred_check
      _
    $region10: #{mlp_forward.1} parent=5 // pred_check_branch
      %204 = sbr.rel (%p201) target = $region12
    $region11: #{mlp_forward.1} parent=5 // pred_region
      %s205 = ssub.s32 %s13, 1
      // Predicated region
      $region13: #{mlp_forward.1} parent=11 // pred_check
        %p206 = pneg %p60
      $region14: #{mlp_forward.1} parent=11 // pred_check_branch
        %208 = sbr.rel (%p206) target = $region16
      $region15: #{mlp_forward.1} parent=11 // pred_region
        _
      $region16: #{mlp_forward.1} parent=11 // pred_fallthru
        _
      // Predicated region
      $region17: #{mlp_forward.1} parent=11 // pred_check
        %p209 = pneg %p81
      $region18: #{mlp_forward.1} parent=11 // pred_check_branch
        %211 = sbr.rel (%p209) target = $region20
      $region19: #{mlp_forward.1} parent=11 // pred_region
        _
      $region20: #{mlp_forward.1} parent=11 // pred_fallthru
        _
      // Predicated region
      $region21: #{mlp_forward.1} parent=11 // pred_check
        %p212 = pneg %p102
      $region22: #{mlp_forward.1} parent=11 // pred_check_branch
        %214 = sbr.rel (%p212) target = $region24
      $region23: #{mlp_forward.1} parent=11 // pred_region
        _
      $region24: #{mlp_forward.1} parent=11 // pred_fallthru
        _
      // Predicated region
      $region25: #{mlp_forward.1} parent=11 // pred_check
        %p215 = pneg %p123
      $region26: #{mlp_forward.1} parent=11 // pred_check_branch
        %217 = sbr.rel (%p215) target = $region28
      $region27: #{mlp_forward.1} parent=11 // pred_region
        _
      $region28: #{mlp_forward.1} parent=11 // pred_fallthru
        _
      // Predicated region
      $region29: #{mlp_forward.1} parent=11 // pred_check
        %p218 = pneg %p144
      $region30: #{mlp_forward.1} parent=11 // pred_check_branch
        %220 = sbr.rel (%p218) target = $region32
      $region31: #{mlp_forward.1} parent=11 // pred_region
        _
      $region32: #{mlp_forward.1} parent=11 // pred_fallthru
        _
      // Predicated region
      $region33: #{mlp_forward.1} parent=11 // pred_check
        %p221 = pneg %p165
      $region34: #{mlp_forward.1} parent=11 // pred_check_branch
        %223 = sbr.rel (%p221) target = $region36
      $region35: #{mlp_forward.1} parent=11 // pred_region
        _
      $region36: #{mlp_forward.1} parent=11 // pred_fallthru
        _
    $region12: #{mlp_forward.1} parent=5 // pred_fallthru
      _
    %p224 = scmp.lt.s32.totalorder %s13, 2
    // Predicated region
    $region37: #{mlp_forward.1} parent=5 // pred_check
      %p225 = pneg %p224
    $region38: #{mlp_forward.1} parent=5 // pred_check_branch
      %227 = sbr.rel (%p225) target = $region40
    $region39: #{mlp_forward.1} parent=5 // pred_region
      // Predicated region
      $region41: #{mlp_forward.1} parent=39 // pred_check
        %p228 = pneg %p33
      $region42: #{mlp_forward.1} parent=39 // pred_check_branch
        %230 = sbr.rel (%p228) target = $region44
      $region43: #{mlp_forward.1} parent=39 // pred_region
        %s231 = smul.u32 16, %s13
        %p232 = scmp.lt.s32.totalorder %s231, 31
        %s233 = scalar_select %p232, %s231, 31
        %s234 = smul.addr %s233, 8
        %s235 = scalar_lea.vmem %s0, %s234
        %s236 = smul.u32 16, %s13
      $region44: #{mlp_forward.1} parent=39 // pred_fallthru
        _
    $region40: #{mlp_forward.1} parent=5 // pred_fallthru
      _
    %p237 = scmp.le.s32.totalorder 1, %s13
    %p238 = scmp.lt.s32.totalorder %s13, 3
    %p239 = pnand %p237, %p238
    %p240 = pneg %p239
    // Predicated region
    $region45: #{mlp_forward.1} parent=5 // pred_check
      _
    $region46: #{mlp_forward.1} parent=5 // pred_check_branch
      %242 = sbr.rel (%p239) target = $region48
    $region47: #{mlp_forward.1} parent=5 // pred_region
      %s243 = ssub.s32 %s13, 1
      %s244 = smul.u32 16, %s18
      %p245 = scmp.lt.s32.totalorder %s244, 31
      %s246 = scalar_select %p245, %s244, 31
      %s247 = smul.addr %s246, 8
      %s248 = scalar_lea.vmem %s0, %s247
      %p249 = pneg %p39
      %p250 = pneg %p36
      %p251 = pneg %p60
      %p252 = pneg %p57
      %p253 = pneg %p81
      %p254 = pneg %p78
      %p255 = pneg %p102
      %p256 = pneg %p99
      %p257 = pneg %p123
      %p258 = pneg %p120
      %p259 = pneg %p144
      %p260 = pneg %p141
      %p261 = pneg %p165
      %p262 = pneg %p162
      %p263 = pneg %p191
      %p264 = pneg %p188
      %s265 = smul.u32 16, %s18
      %p266 = scmp.lt.s32.totalorder %s265, 31
      %s267 = scalar_select %p266, %s265, 31
      %s268 = smul.addr %s267, 8
      %s269 = scalar_lea.vmem %s7, %s268
      %s270 = smul.u32 16, %s18
      %p271 = scmp.lt.s32.totalorder %s270, 31
      %s272 = scalar_select %p271, %s270, 31
      %s273 = smul.addr %s272, 8
      %s274 = scalar_lea.vmem %s0, %s273
      %s275 = smul.u32 16, %s18
      %s276 = smul.u32 16, %s18
      %p277 = scmp.lt.s32.totalorder %s276, 31
      %s278 = scalar_select %p277, %s276, 31
      %s279 = smul.addr %s278, 8
      %s280 = scalar_lea.vmem %s7, %s279
      %s281 = smul.u32 16, %s18
      %v283 = vld [vmem:[%s274] sm:$0xff]
      %v284 = vld [vmem:[%s274 + $0x8] sm:$0xff]
      %v285 = vld [vmem:[%s274 + $0x10] sm:$0xff]
      %v286 = vld [vmem:[%s274 + $0x18] sm:$0xff]
      %v287 = vld [vmem:[%s274 + $0x20] sm:$0xff]
      %v288 = vld [vmem:[%s274 + $0x28] sm:$0xff]
      %v289 = vld [vmem:[%s274 + $0x30] sm:$0xff]
      %v290 = vld [vmem:[%s274 + $0x38] sm:$0xff]
      %v291 = vld [vmem:[%s274 + $0x40] sm:$0xff]
      %v292 = vld [vmem:[%s274 + $0x48] sm:$0xff]
      %v293 = vld [vmem:[%s274 + $0x50] sm:$0xff]
      %v294 = vld [vmem:[%s274 + $0x58] sm:$0xff]
      %v295 = vld [vmem:[%s274 + $0x60] sm:$0xff]
      %v296 = vld [vmem:[%s274 + $0x68] sm:$0xff]
      %v297 = vld [vmem:[%s274 + $0x70] sm:$0xff]
      %v298 = vld [vmem:[%s274 + $0x78] sm:$0xff]
      %v299 = vld [vmem:[%s1] sm:$0xff]
      %v300 = vld [vmem:[%s1 + $0x8] sm:$0xff]
      %v301 = vld [vmem:[%s2] sm:$0x3]
      %v302 = vpack.c.bf16 %v284, %v283
      %v303 = vpack.c.bf16 %v286, %v285
      %v304 = vpack.c.bf16 %v288, %v287
      %v305 = vpack.c.bf16 %v290, %v289
      %v306 = vpack.c.bf16 %v292, %v291
      %v307 = vpack.c.bf16 %v294, %v293
      %v308 = vpack.c.bf16 %v296, %v295
      %v309 = vpack.c.bf16 %v298, %v297
      %v311 = vlaneseq
      %v312 = vshrl.u32 %v311, 7
      %v313 = vsub.s32 0, %v312
      %v314 = vrot.slane %v301, %v313
      %v315 = vlaneseq
      %v316 = vshrl.u32 %v315, 7
      %v317 = vsub.s32 1, %v316
      %v318 = vrot.slane %v301, %v317
      %v323 = vunpack.c.l.b16 %v299
      %v324 = vunpack.c.h.b16 %v299
      %v325 = vunpack.c.l.b16 %v300
      %v326 = vunpack.c.h.b16 %v300
      %v327 = vpack.c.b16 %v325, %v323
      %v328 = vpack.c.b16 %v326, %v324
      %vm331 = vcmask 130048
      %v333 = vsel %vm331, %v302, 0
      %v336 = vsel %vm331, %v303, 0
      %v339 = vsel %vm331, %v304, 0
      %v342 = vsel %vm331, %v305, 0
      %v345 = vsel %vm331, %v306, 0
      %v348 = vsel %vm331, %v307, 0
      %v351 = vsel %vm331, %v308, 0
      %v354 = vsel %vm331, %v309, 0
      %356 = vmatprep.subr.bf16.mxu0 %v328
      %357 = vmatpush1.bf16.msra.mxu0 %v327
      %358 = vmatprep.subr.bf16.mxu0 0
      %359 = vmatpush1.bf16.msra.mxu0 0
      %360 = vmatprep.subr.bf16.mxu0 0
      %361 = vmatpush1.bf16.msra.mxu0 0
      %362 = vmatprep.subr.bf16.mxu0 0
      %363 = vmatpush1.bf16.msra.mxu0 0
      %364 = vmatprep.subr.bf16.mxu0 0
      %365 = vmatpush1.bf16.msra.mxu0 0
      %366 = vmatprep.subr.bf16.mxu0 0
      %367 = vmatpush1.bf16.msra.mxu0 0
      %368 = vmatprep.subr.bf16.mxu0 0
      %369 = vmatpush1.bf16.msra.mxu0 0
      %370 = vmatprep.subr.bf16.mxu0 0
      %371 = vmatpush1.bf16.msra.mxu0 0
      %372 = vmatprep.subr.bf16.mxu0 0
      %373 = vmatpush1.bf16.msra.mxu0 0
      %374 = vmatprep.subr.bf16.mxu0 0
      %375 = vmatpush1.bf16.msra.mxu0 0
      %376 = vmatprep.subr.bf16.mxu0 0
      %377 = vmatpush1.bf16.msra.mxu0 0
      %378 = vmatprep.subr.bf16.mxu0 0
      %379 = vmatpush1.bf16.msra.mxu0 0
      %380 = vmatprep.subr.bf16.mxu0 0
      %381 = vmatpush1.bf16.msra.mxu0 0
      %382 = vmatprep.subr.bf16.mxu0 0
      %383 = vmatpush1.bf16.msra.mxu0 0
      %384 = vmatprep.subr.bf16.mxu0 0
      %385 = vmatpush1.bf16.msra.mxu0 0
      %386 = vmatprep.subr.bf16.mxu0 0
      %387 = vmatpush1.bf16.msra.mxu0 0
      %388 = vmatprep.mubr.bf16.mxu0 0
      %389 = vmatmul.mubr.bf16.gmra.mrb[0].mxu0 %v333
      %v390 = vpop.f32.mrb[0].mxu0
      %v391 = vadd.f32 %v314, %v390
      %v392 = vpop.f32.mrb[0].mxu0
      %v393 = vadd.f32 %v318, %v392
      %v394 = vpop.f32.mrb[0].mxu0
      %v395 = vadd.f32 %v314, %v394
      %v396 = vpop.f32.mrb[0].mxu0
      %v397 = vadd.f32 %v318, %v396
      %398 = vmatprep.mubr.bf16.mxu0 0
      %399 = vmatmul.mubr.bf16.gmra.mrb[0].mxu0 %v336
      %v400 = vpop.f32.mrb[0].mxu0
      %v401 = vadd.f32 %v314, %v400
      %v402 = vpop.f32.mrb[0].mxu0
      %v403 = vadd.f32 %v318, %v402
      %v404 = vpop.f32.mrb[0].mxu0
      %v405 = vadd.f32 %v314, %v404
      %v406 = vpop.f32.mrb[0].mxu0
      %v407 = vadd.f32 %v318, %v406
      %408 = vmatprep.mubr.bf16.mxu0 0
      %409 = vmatmul.mubr.bf16.gmra.mrb[0].mxu0 %v339
      %v410 = vpop.f32.mrb[0].mxu0
      %v411 = vadd.f32 %v314, %v410
      %v412 = vpop.f32.mrb[0].mxu0
      %v413 = vadd.f32 %v318, %v412
      %v414 = vpop.f32.mrb[0].mxu0
      %v415 = vadd.f32 %v314, %v414
      %v416 = vpop.f32.mrb[0].mxu0
      %v417 = vadd.f32 %v318, %v416
      %418 = vmatprep.mubr.bf16.mxu0 0
      %419 = vmatmul.mubr.bf16.gmra.mrb[0].mxu0 %v342
      %v420 = vpop.f32.mrb[0].mxu0
      %v421 = vadd.f32 %v314, %v420
      %v422 = vpop.f32.mrb[0].mxu0
      %v423 = vadd.f32 %v318, %v422
      %v424 = vpop.f32.mrb[0].mxu0
      %v425 = vadd.f32 %v314, %v424
      %v426 = vpop.f32.mrb[0].mxu0
      %v427 = vadd.f32 %v318, %v426
      %428 = vmatprep.mubr.bf16.mxu0 0
      %429 = vmatmul.mubr.bf16.gmra.mrb[0].mxu0 %v345
      %v430 = vpop.f32.mrb[0].mxu0
      %v431 = vadd.f32 %v314, %v430
      %v432 = vpop.f32.mrb[0].mxu0
      %v433 = vadd.f32 %v318, %v432
      %v434 = vpop.f32.mrb[0].mxu0
      %v435 = vadd.f32 %v314, %v434
      %v436 = vpop.f32.mrb[0].mxu0
      %v437 = vadd.f32 %v318, %v436
      %438 = vmatprep.mubr.bf16.mxu0 0
      %439 = vmatmul.mubr.bf16.gmra.mrb[0].mxu0 %v348
      %v440 = vpop.f32.mrb[0].mxu0
      %v441 = vadd.f32 %v314, %v440
      %v442 = vpop.f32.mrb[0].mxu0
      %v443 = vadd.f32 %v318, %v442
      %v444 = vpop.f32.mrb[0].mxu0
      %v445 = vadd.f32 %v314, %v444
      %v446 = vpop.f32.mrb[0].mxu0
      %v447 = vadd.f32 %v318, %v446
      %448 = vmatprep.mubr.bf16.mxu0 0
      %449 = vmatmul.mubr.bf16.gmra.mrb[0].mxu0 %v351
      %v450 = vpop.f32.mrb[0].mxu0
      %v451 = vadd.f32 %v314, %v450
      %v452 = vpop.f32.mrb[0].mxu0
      %v453 = vadd.f32 %v318, %v452
      %v454 = vpop.f32.mrb[0].mxu0
      %v455 = vadd.f32 %v314, %v454
      %v456 = vpop.f32.mrb[0].mxu0
      %v457 = vadd.f32 %v318, %v456
      %458 = vmatprep.mubr.bf16.mxu0 0
      %459 = vmatmul.mubr.bf16.gmra.mrb[0].mxu0 %v354
      %v460 = vpop.f32.mrb[0].mxu0
      %v461 = vadd.f32 %v314, %v460
      %v462 = vpop.f32.mrb[0].mxu0
      %v463 = vadd.f32 %v318, %v462
      %v464 = vpop.f32.mrb[0].mxu0
      %v465 = vadd.f32 %v314, %v464
      %v466 = vpop.f32.mrb[0].mxu0
      %v467 = vadd.f32 %v318, %v466
      %468 = vdwg.mxu0
      %v469 = vmax.f32 %v391, 0.0
      %v470 = vmax.f32 %v393, 0.0
      %v471 = vmax.f32 %v395, 0.0
      %v472 = vmax.f32 %v397, 0.0
      %v473 = vmax.f32 %v401, 0.0
      %v474 = vmax.f32 %v403, 0.0
      %v475 = vmax.f32 %v405, 0.0
      %v476 = vmax.f32 %v407, 0.0
      %v477 = vmax.f32 %v411, 0.0
      %v478 = vmax.f32 %v413, 0.0
      %v479 = vmax.f32 %v415, 0.0
      %v480 = vmax.f32 %v417, 0.0
      %v481 = vmax.f32 %v421, 0.0
      %v482 = vmax.f32 %v423, 0.0
      %v483 = vmax.f32 %v425, 0.0
      %v484 = vmax.f32 %v427, 0.0
      %v485 = vmax.f32 %v431, 0.0
      %v486 = vmax.f32 %v433, 0.0
      %v487 = vmax.f32 %v435, 0.0
      %v488 = vmax.f32 %v437, 0.0
      %v489 = vmax.f32 %v441, 0.0
      %v490 = vmax.f32 %v443, 0.0
      %v491 = vmax.f32 %v445, 0.0
      %v492 = vmax.f32 %v447, 0.0
      %v493 = vmax.f32 %v451, 0.0
      %v494 = vmax.f32 %v453, 0.0
      %v495 = vmax.f32 %v455, 0.0
      %v496 = vmax.f32 %v457, 0.0
      %v497 = vmax.f32 %v461, 0.0
      %v498 = vmax.f32 %v463, 0.0
      %v499 = vmax.f32 %v465, 0.0
      %v500 = vmax.f32 %v467, 0.0
      %v501 = vld [vmem:[%s3] sm:$0xf]
      %v502 = vld [vmem:[%s3 + $0x4] sm:$0xf]
      %v503 = vld [vmem:[%s3 + $0x8] sm:$0xf]
      %v504 = vld [vmem:[%s3 + $0xc] sm:$0xf]
      %v505 = vld [vmem:[%s3 + $0x10] sm:$0xf]
      %v506 = vld [vmem:[%s3 + $0x14] sm:$0xf]
      %v507 = vld [vmem:[%s3 + $0x18] sm:$0xf]
      %v508 = vld [vmem:[%s3 + $0x1c] sm:$0xf]
      %v509 = vld [vmem:[%s3 + $0x20] sm:$0xf]
      %v510 = vld [vmem:[%s3 + $0x24] sm:$0xf]
      %v511 = vld [vmem:[%s3 + $0x28] sm:$0xf]
      %v512 = vld [vmem:[%s3 + $0x2c] sm:$0xf]
      %v513 = vld [vmem:[%s3 + $0x30] sm:$0xf]
      %v514 = vld [vmem:[%s3 + $0x34] sm:$0xf]
      %v515 = vld [vmem:[%s3 + $0x38] sm:$0xf]
      %v516 = vld [vmem:[%s3 + $0x3c] sm:$0xf]
      %v517 = vld [vmem:[%s3 + $0x40] sm:$0xf]
      %v518 = vld [vmem:[%s3 + $0x44] sm:$0xf]
      %v519 = vld [vmem:[%s3 + $0x48] sm:$0xf]
      %v520 = vld [vmem:[%s3 + $0x4c] sm:$0xf]
      %v521 = vld [vmem:[%s3 + $0x50] sm:$0xf]
      %v522 = vld [vmem:[%s3 + $0x54] sm:$0xf]
      %v523 = vld [vmem:[%s3 + $0x58] sm:$0xf]
      %v524 = vld [vmem:[%s3 + $0x5c] sm:$0xf]
      %v525 = vld [vmem:[%s3 + $0x60] sm:$0xf]
      %v526 = vld [vmem:[%s3 + $0x64] sm:$0xf]
      %v527 = vld [vmem:[%s3 + $0x68] sm:$0xf]
      %v528 = vld [vmem:[%s3 + $0x6c] sm:$0xf]
      %v529 = vld [vmem:[%s3 + $0x70] sm:$0xf]
      %v530 = vld [vmem:[%s3 + $0x74] sm:$0xf]
      %v531 = vld [vmem:[%s3 + $0x78] sm:$0xf]
      %v532 = vld [vmem:[%s3 + $0x7c] sm:$0xf]
      %v533 = vld [vmem:[%s4] sm:$0x1]
      %v534 = vpack.c.bf16 %v471, %v469
      %v535 = vpack.c.bf16 %v472, %v470
      %v536 = vpack.c.bf16 %v475, %v473
      %v537 = vpack.c.bf16 %v476, %v474
      %v538 = vpack.c.bf16 %v479, %v477
      %v539 = vpack.c.bf16 %v480, %v478
      %v540 = vpack.c.bf16 %v483, %v481
      %v541 = vpack.c.bf16 %v484, %v482
      %v542 = vpack.c.bf16 %v487, %v485
      %v543 = vpack.c.bf16 %v488, %v486
      %v544 = vpack.c.bf16 %v491, %v489
      %v545 = vpack.c.bf16 %v492, %v490
      %v546 = vpack.c.bf16 %v495, %v493
      %v547 = vpack.c.bf16 %v496, %v494
      %v548 = vpack.c.bf16 %v499, %v497
      %v549 = vpack.c.bf16 %v500, %v498
      %v551 = vlaneseq
      %v552 = vshrl.u32 %v551, 7
      %v553 = vsub.s32 0, %v552
      %v554 = vrot.slane %v533, %v553
      %v588 = vunpack.c.l.b16 %v501
      %v589 = vunpack.c.l.b16 %v502
      %v590 = vunpack.c.l.b16 %v503
      %v591 = vunpack.c.l.b16 %v504
      %v592 = vunpack.c.l.b16 %v505
      %v593 = vunpack.c.l.b16 %v506
      %v594 = vunpack.c.l.b16 %v507
      %v595 = vunpack.c.l.b16 %v508
      %v596 = vunpack.c.l.b16 %v509
      %v597 = vunpack.c.l.b16 %v510
      %v598 = vunpack.c.l.b16 %v511
      %v599 = vunpack.c.l.b16 %v512
      %v600 = vunpack.c.l.b16 %v513
      %v601 = vunpack.c.l.b16 %v514
      %v602 = vunpack.c.l.b16 %v515
      %v603 = vunpack.c.l.b16 %v516
      %v604 = vunpack.c.l.b16 %v517
      %v605 = vunpack.c.l.b16 %v518
      %v606 = vunpack.c.l.b16 %v519
      %v607 = vunpack.c.l.b16 %v520
      %v608 = vunpack.c.l.b16 %v521
      %v609 = vunpack.c.l.b16 %v522
      %v610 = vunpack.c.l.b16 %v523
      %v611 = vunpack.c.l.b16 %v524
      %v612 = vunpack.c.l.b16 %v525
      %v613 = vunpack.c.l.b16 %v526
      %v614 = vunpack.c.l.b16 %v527
      %v615 = vunpack.c.l.b16 %v528
      %v616 = vunpack.c.l.b16 %v529
      %v617 = vunpack.c.l.b16 %v530
      %v618 = vunpack.c.l.b16 %v531
      %v619 = vunpack.c.l.b16 %v532
      %v620 = vpack.c.b16 %v589, %v588
      %v621 = vpack.c.b16 %v591, %v590
      %v622 = vpack.c.b16 %v593, %v592
      %v623 = vpack.c.b16 %v595, %v594
      %v624 = vpack.c.b16 %v597, %v596
      %v625 = vpack.c.b16 %v599, %v598
      %v626 = vpack.c.b16 %v601, %v600
      %v627 = vpack.c.b16 %v603, %v602
      %v628 = vpack.c.b16 %v605, %v604
      %v629 = vpack.c.b16 %v607, %v606
      %v630 = vpack.c.b16 %v609, %v608
      %v631 = vpack.c.b16 %v611, %v610
      %v632 = vpack.c.b16 %v613, %v612
      %v633 = vpack.c.b16 %v615, %v614
      %v634 = vpack.c.b16 %v617, %v616
      %v635 = vpack.c.b16 %v619, %v618
      %652 = vmatprep.subr.bf16.mxu0 0
      %653 = vmatpush1.bf16.msra.mxu0 %v620
      %654 = vmatprep.subr.bf16.mxu0 0
      %655 = vmatpush1.bf16.msra.mxu0 %v621
      %656 = vmatprep.subr.bf16.mxu0 0
      %657 = vmatpush1.bf16.msra.mxu0 %v622
      %658 = vmatprep.subr.bf16.mxu0 0
      %659 = vmatpush1.bf16.msra.mxu0 %v623
      %660 = vmatprep.subr.bf16.mxu0 0
      %661 = vmatpush1.bf16.msra.mxu0 %v624
      %662 = vmatprep.subr.bf16.mxu0 0
      %663 = vmatpush1.bf16.msra.mxu0 %v625
      %664 = vmatprep.subr.bf16.mxu0 0
      %665 = vmatpush1.bf16.msra.mxu0 %v626
      %666 = vmatprep.subr.bf16.mxu0 0
      %667 = vmatpush1.bf16.msra.mxu0 %v627
      %668 = vmatprep.subr.bf16.mxu0 0
      %669 = vmatpush1.bf16.msra.mxu0 %v628
      %670 = vmatprep.subr.bf16.mxu0 0
      %671 = vmatpush1.bf16.msra.mxu0 %v629
      %672 = vmatprep.subr.bf16.mxu0 0
      %673 = vmatpush1.bf16.msra.mxu0 %v630
      %674 = vmatprep.subr.bf16.mxu0 0
      %675 = vmatpush1.bf16.msra.mxu0 %v631
      %676 = vmatprep.subr.bf16.mxu0 0
      %677 = vmatpush1.bf16.msra.mxu0 %v632
      %678 = vmatprep.subr.bf16.mxu0 0
      %679 = vmatpush1.bf16.msra.mxu0 %v633
      %680 = vmatprep.subr.bf16.mxu0 0
      %681 = vmatpush1.bf16.msra.mxu0 %v634
      %682 = vmatprep.subr.bf16.mxu0 0
      %683 = vmatpush1.bf16.msra.mxu0 %v635
      %684 = vmatprep.mubr.bf16.mxu0 %v535
      %685 = vmatmul.mubr.bf16.gmra.mrb[0].mxu0 %v534
      %v686 = vpop.f32.mrb[0].mxu0
      %v687 = vadd.f32 %v554, %v686
      %v688 = vpop.f32.mrb[0].mxu0
      %v689 = vpop.f32.mrb[0].mxu0
      %v690 = vadd.f32 %v554, %v689
      %v691 = vpop.f32.mrb[0].mxu0
      %692 = vmatprep.mubr.bf16.mxu0 %v537
      %693 = vmatmul.mubr.bf16.gmra.mrb[0].mxu0 %v536
      %v694 = vpop.f32.mrb[0].mxu0
      %v695 = vadd.f32 %v554, %v694
      %v696 = vpop.f32.mrb[0].mxu0
      %v697 = vpop.f32.mrb[0].mxu0
      %v698 = vadd.f32 %v554, %v697
      %v699 = vpop.f32.mrb[0].mxu0
      %700 = vmatprep.mubr.bf16.mxu0 %v539
      %701 = vmatmul.mubr.bf16.gmra.mrb[0].mxu0 %v538
      %v702 = vpop.f32.mrb[0].mxu0
      %v703 = vadd.f32 %v554, %v702
      %v704 = vpop.f32.mrb[0].mxu0
      %v705 = vpop.f32.mrb[0].mxu0
      %v706 = vadd.f32 %v554, %v705
      %v707 = vpop.f32.mrb[0].mxu0
      %708 = vmatprep.mubr.bf16.mxu0 %v541
      %709 = vmatmul.mubr.bf16.gmra.mrb[0].mxu0 %v540
      %v710 = vpop.f32.mrb[0].mxu0
      %v711 = vadd.f32 %v554, %v710
      %v712 = vpop.f32.mrb[0].mxu0
      %v713 = vpop.f32.mrb[0].mxu0
      %v714 = vadd.f32 %v554, %v713
      %v715 = vpop.f32.mrb[0].mxu0
      %716 = vmatprep.mubr.bf16.mxu0 %v543
      %717 = vmatmul.mubr.bf16.gmra.mrb[0].mxu0 %v542
      %v718 = vpop.f32.mrb[0].mxu0
      %v719 = vadd.f32 %v554, %v718
      %v720 = vpop.f32.mrb[0].mxu0
      %v721 = vpop.f32.mrb[0].mxu0
      %v722 = vadd.f32 %v554, %v721
      %v723 = vpop.f32.mrb[0].mxu0
      %724 = vmatprep.mubr.bf16.mxu0 %v545
      %725 = vmatmul.mubr.bf16.gmra.mrb[0].mxu0 %v544
      %v726 = vpop.f32.mrb[0].mxu0
      %v727 = vadd.f32 %v554, %v726
      %v728 = vpop.f32.mrb[0].mxu0
      %v729 = vpop.f32.mrb[0].mxu0
      %v730 = vadd.f32 %v554, %v729
      %v731 = vpop.f32.mrb[0].mxu0
      %732 = vmatprep.mubr.bf16.mxu0 %v547
      %733 = vmatmul.mubr.bf16.gmra.mrb[0].mxu0 %v546
      %v734 = vpop.f32.mrb[0].mxu0
      %v735 = vadd.f32 %v554, %v734
      %v736 = vpop.f32.mrb[0].mxu0
      %v737 = vpop.f32.mrb[0].mxu0
      %v738 = vadd.f32 %v554, %v737
      %v739 = vpop.f32.mrb[0].mxu0
      %740 = vmatprep.mubr.bf16.mxu0 %v549
      %741 = vmatmul.mubr.bf16.gmra.mrb[0].mxu0 %v548
      %v742 = vpop.f32.mrb[0].mxu0
      %v743 = vadd.f32 %v554, %v742
      %v744 = vpop.f32.mrb[0].mxu0
      %v745 = vpop.f32.mrb[0].mxu0
      %v746 = vadd.f32 %v554, %v745
      %v747 = vpop.f32.mrb[0].mxu0
      %748 = vdwg.mxu0
      %v749 = vmax.f32 %v687, 0.0
      %v750 = vmax.f32 %v690, 0.0
      %v751 = vmax.f32 %v695, 0.0
      %v752 = vmax.f32 %v698, 0.0
      %v753 = vmax.f32 %v703, 0.0
      %v754 = vmax.f32 %v706, 0.0
      %v755 = vmax.f32 %v711, 0.0
      %v756 = vmax.f32 %v714, 0.0
      %v757 = vmax.f32 %v719, 0.0
      %v758 = vmax.f32 %v722, 0.0
      %v759 = vmax.f32 %v727, 0.0
      %v760 = vmax.f32 %v730, 0.0
      %v761 = vmax.f32 %v735, 0.0
      %v762 = vmax.f32 %v738, 0.0
      %v763 = vmax.f32 %v743, 0.0
      %v764 = vmax.f32 %v746, 0.0
      %v765 = vld [vmem:[%s5] sm:$0xf]
      %v766 = vld [vmem:[%s5 + $0x4] sm:$0xf]
      %v767 = vld [vmem:[%s5 + $0x8] sm:$0xf]
      %v768 = vld [vmem:[%s5 + $0xc] sm:$0xf]
      %v769 = vld [vmem:[%s5 + $0x10] sm:$0xf]
      %v770 = vld [vmem:[%s5 + $0x14] sm:$0xf]
      %v771 = vld [vmem:[%s5 + $0x18] sm:$0xf]
      %v772 = vld [vmem:[%s5 + $0x1c] sm:$0xf]
      %v773 = vld [vmem:[%s5 + $0x20] sm:$0xf]
      %v774 = vld [vmem:[%s5 + $0x24] sm:$0xf]
      %v775 = vld [vmem:[%s5 + $0x28] sm:$0xf]
      %v776 = vld [vmem:[%s5 + $0x2c] sm:$0xf]
      %v777 = vld [vmem:[%s5 + $0x30] sm:$0xf]
      %v778 = vld [vmem:[%s5 + $0x34] sm:$0xf]
      %v779 = vld [vmem:[%s5 + $0x38] sm:$0xf]
      %v780 = vld [vmem:[%s5 + $0x3c] sm:$0xf]
      %v781 = vld [vmem:[%s6] sm:$0x1]
      %v782 = vpack.c.bf16 %v750, %v749
      %v783 = vpack.c.bf16 %v752, %v751
      %v784 = vpack.c.bf16 %v754, %v753
      %v785 = vpack.c.bf16 %v756, %v755
      %v786 = vpack.c.bf16 %v758, %v757
      %v787 = vpack.c.bf16 %v760, %v759
      %v788 = vpack.c.bf16 %v762, %v761
      %v789 = vpack.c.bf16 %v764, %v763
      %v791 = vlaneseq
      %v792 = vshrl.u32 %v791, 7
      %v793 = vsub.s32 0, %v792
      %v794 = vrot.slane %v781, %v793
      %v812 = vunpack.c.l.b16 %v765
      %v813 = vunpack.c.l.b16 %v766
      %v814 = vunpack.c.l.b16 %v767
      %v815 = vunpack.c.l.b16 %v768
      %v816 = vunpack.c.l.b16 %v769
      %v817 = vunpack.c.l.b16 %v770
      %v818 = vunpack.c.l.b16 %v771
      %v819 = vunpack.c.l.b16 %v772
      %v820 = vunpack.c.l.b16 %v773
      %v821 = vunpack.c.l.b16 %v774
      %v822 = vunpack.c.l.b16 %v775
      %v823 = vunpack.c.l.b16 %v776
      %v824 = vunpack.c.l.b16 %v777
      %v825 = vunpack.c.l.b16 %v778
      %v826 = vunpack.c.l.b16 %v779
      %v827 = vunpack.c.l.b16 %v780
      %v828 = vpack.c.b16 %v813, %v812
      %v829 = vpack.c.b16 %v815, %v814
      %v830 = vpack.c.b16 %v817, %v816
      %v831 = vpack.c.b16 %v819, %v818
      %v832 = vpack.c.b16 %v821, %v820
      %v833 = vpack.c.b16 %v823, %v822
      %v834 = vpack.c.b16 %v825, %v824
      %v835 = vpack.c.b16 %v827, %v826
      %844 = vmatprep.subr.bf16.mxu0 0
      %845 = vmatpush1.bf16.msra.mxu0 %v828
      %846 = vmatprep.subr.bf16.mxu0 0
      %847 = vmatpush1.bf16.msra.mxu0 %v829
      %848 = vmatprep.subr.bf16.mxu0 0
      %849 = vmatpush1.bf16.msra.mxu0 %v830
      %850 = vmatprep.subr.bf16.mxu0 0
      %851 = vmatpush1.bf16.msra.mxu0 %v831
      %852 = vmatprep.subr.bf16.mxu0 0
      %853 = vmatpush1.bf16.msra.mxu0 %v832
      %854 = vmatprep.subr.bf16.mxu0 0
      %855 = vmatpush1.bf16.msra.mxu0 %v833
      %856 = vmatprep.subr.bf16.mxu0 0
      %857 = vmatpush1.bf16.msra.mxu0 %v834
      %858 = vmatprep.subr.bf16.mxu0 0
      %859 = vmatpush1.bf16.msra.mxu0 %v835
      %860 = vmatprep.subr.bf16.mxu0 0
      %861 = vmatpush1.bf16.msra.mxu0 0
      %862 = vmatprep.subr.bf16.mxu0 0
      %863 = vmatpush1.bf16.msra.mxu0 0
      %864 = vmatprep.subr.bf16.mxu0 0
      %865 = vmatpush1.bf16.msra.mxu0 0
      %866 = vmatprep.subr.bf16.mxu0 0
      %867 = vmatpush1.bf16.msra.mxu0 0
      %868 = vmatprep.subr.bf16.mxu0 0
      %869 = vmatpush1.bf16.msra.mxu0 0
      %870 = vmatprep.subr.bf16.mxu0 0
      %871 = vmatpush1.bf16.msra.mxu0 0
      %872 = vmatprep.subr.bf16.mxu0 0
      %873 = vmatpush1.bf16.msra.mxu0 0
      %874 = vmatprep.subr.bf16.mxu0 0
      %875 = vmatpush1.bf16.msra.mxu0 0
      %876 = vmatprep.mubr.bf16.mxu0 0
      %877 = vmatmul.mubr.bf16.gmra.mrb[0].mxu0 %v782
      %v878 = vpop.f32.mrb[0].mxu0
      %v879 = vadd.f32 %v794, %v878
      %v880 = vpop.f32.mrb[0].mxu0
      %v881 = vpop.f32.mrb[0].mxu0
      %v882 = vadd.f32 %v794, %v881
      %v883 = vpop.f32.mrb[0].mxu0
      %884 = vmatprep.mubr.bf16.mxu0 0
      %885 = vmatmul.mubr.bf16.gmra.mrb[0].mxu0 %v783
      %v886 = vpop.f32.mrb[0].mxu0
      %v887 = vadd.f32 %v794, %v886
      %v888 = vpop.f32.mrb[0].mxu0
      %v889 = vpop.f32.mrb[0].mxu0
      %v890 = vadd.f32 %v794, %v889
      %v891 = vpop.f32.mrb[0].mxu0
      %892 = vmatprep.mubr.bf16.mxu0 0
      %893 = vmatmul.mubr.bf16.gmra.mrb[0].mxu0 %v784
      %v894 = vpop.f32.mrb[0].mxu0
      %v895 = vadd.f32 %v794, %v894
      %v896 = vpop.f32.mrb[0].mxu0
      %v897 = vpop.f32.mrb[0].mxu0
      %v898 = vadd.f32 %v794, %v897
      %v899 = vpop.f32.mrb[0].mxu0
      %900 = vmatprep.mubr.bf16.mxu0 0
      %901 = vmatmul.mubr.bf16.gmra.mrb[0].mxu0 %v785
      %v902 = vpop.f32.mrb[0].mxu0
      %v903 = vadd.f32 %v794, %v902
      %v904 = vpop.f32.mrb[0].mxu0
      %v905 = vpop.f32.mrb[0].mxu0
      %v906 = vadd.f32 %v794, %v905
      %v907 = vpop.f32.mrb[0].mxu0
      %908 = vmatprep.mubr.bf16.mxu0 0
      %909 = vmatmul.mubr.bf16.gmra.mrb[0].mxu0 %v786
      %v910 = vpop.f32.mrb[0].mxu0
      %v911 = vadd.f32 %v794, %v910
      %v912 = vpop.f32.mrb[0].mxu0
      %v913 = vpop.f32.mrb[0].mxu0
      %v914 = vadd.f32 %v794, %v913
      %v915 = vpop.f32.mrb[0].mxu0
      %916 = vmatprep.mubr.bf16.mxu0 0
      %917 = vmatmul.mubr.bf16.gmra.mrb[0].mxu0 %v787
      %v918 = vpop.f32.mrb[0].mxu0
      %v919 = vadd.f32 %v794, %v918
      %v920 = vpop.f32.mrb[0].mxu0
      %v921 = vpop.f32.mrb[0].mxu0
      %v922 = vadd.f32 %v794, %v921
      %v923 = vpop.f32.mrb[0].mxu0
      %924 = vmatprep.mubr.bf16.mxu0 0
      %925 = vmatmul.mubr.bf16.gmra.mrb[0].mxu0 %v788
      %v926 = vpop.f32.mrb[0].mxu0
      %v927 = vadd.f32 %v794, %v926
      %v928 = vpop.f32.mrb[0].mxu0
      %v929 = vpop.f32.mrb[0].mxu0
      %v930 = vadd.f32 %v794, %v929
      %v931 = vpop.f32.mrb[0].mxu0
      %932 = vmatprep.mubr.bf16.mxu0 0
      %933 = vmatmul.mubr.bf16.gmra.mrb[0].mxu0 %v789
      %v934 = vpop.f32.mrb[0].mxu0
      %v935 = vadd.f32 %v794, %v934
      %v936 = vpop.f32.mrb[0].mxu0
      %v937 = vpop.f32.mrb[0].mxu0
      %v938 = vadd.f32 %v794, %v937
      %v939 = vpop.f32.mrb[0].mxu0
      %940 = vdwg.mxu0
      %941 = vst [vmem:[%s280] sm:$0xff] %v879
      %942 = vst [vmem:[%s280 + $0x8] sm:$0xff] %v882
      %943 = vst [vmem:[%s280 + $0x10] sm:$0xff] %v887
      %944 = vst [vmem:[%s280 + $0x18] sm:$0xff] %v890
      %945 = vst [vmem:[%s280 + $0x20] sm:$0xff] %v895
      %946 = vst [vmem:[%s280 + $0x28] sm:$0xff] %v898
      %947 = vst [vmem:[%s280 + $0x30] sm:$0xff] %v903
      %948 = vst [vmem:[%s280 + $0x38] sm:$0xff] %v906
      %949 = vst [vmem:[%s280 + $0x40] sm:$0xff] %v911
      %950 = vst [vmem:[%s280 + $0x48] sm:$0xff] %v914
      %951 = vst [vmem:[%s280 + $0x50] sm:$0xff] %v919
      %952 = vst [vmem:[%s280 + $0x58] sm:$0xff] %v922
      %953 = vst [vmem:[%s280 + $0x60] sm:$0xff] %v927
      %954 = vst [vmem:[%s280 + $0x68] sm:$0xff] %v930
      %955 = vst [vmem:[%s280 + $0x70] sm:$0xff] %v935
      %956 = vst [vmem:[%s280 + $0x78] sm:$0xff] %v938
      %s957 = smul.u32 16, %s18
      %p958 = scmp.lt.s32.totalorder %s957, 31
      %s959 = scalar_select %p958, %s957, 31
      %s960 = smul.addr %s959, 8
      %s961 = scalar_lea.vmem %s7, %s960
      // Predicated region
      $region49: #{mlp_forward.1} parent=47 // pred_check
        %p962 = pneg %p188
      $region50: #{mlp_forward.1} parent=47 // pred_check_branch
        %964 = sbr.rel (%p962) target = $region52
      $region51: #{mlp_forward.1} parent=47 // pred_region
        %s965 = smul.u32 16, %s18
      $region52: #{mlp_forward.1} parent=47 // pred_fallthru
        _
    $region48: #{mlp_forward.1} parent=5 // pred_fallthru
      _
    %p966 = scmp.le.s32.totalorder 2, %s13
    // Predicated region
    $region53: #{mlp_forward.1} parent=5 // pred_check
      %p967 = pneg %p966
    $region54: #{mlp_forward.1} parent=5 // pred_check_branch
      %969 = sbr.rel (%p967) target = $region56
    $region55: #{mlp_forward.1} parent=5 // pred_region
      %s970 = ssub.s32 %s13, 2
      // Predicated region
      $region57: #{mlp_forward.1} parent=55 // pred_check
        %p971 = pneg %p194
      $region58: #{mlp_forward.1} parent=55 // pred_check_branch
        %973 = sbr.rel (%p971) target = $region60
      $region59: #{mlp_forward.1} parent=55 // pred_region
        %s974 = smul.u32 16, %s19
        %p975 = scmp.lt.s32.totalorder %s974, 31
        %s976 = scalar_select %p975, %s974, 31
        %s977 = smul.addr %s976, 8
        %s978 = scalar_lea.vmem %s7, %s977
      $region60: #{mlp_forward.1} parent=55 // pred_fallthru
        _
    $region56: #{mlp_forward.1} parent=5 // pred_fallthru
      _
  $region6: #{mlp_forward.1} parent=0 // loop_footer
    %s17 = sadd.s32 1, %s13
  $region7: #{mlp_forward.1} parent=0 // loop_footer_branch
    %12 = sbr.rel target = $region3
  $region8: #{mlp_forward.1} parent=0 // loop_exit
    _

</llo_original>
